<compile_context>
chip_gen: v7x
topology: tpu7x:2x2x1
jax: 0.10.0
libtpu: 0.0.40
codegen_flags: <defaults>
</compile_context>

<pallas_src>
import functools

import jax
import jax.numpy as jnp
from jax.experimental import pallas as pl
from jax.experimental.pallas import tpu as pltpu

LANE = 128
SUBLANE = 8
HIDDEN = 30  # fixed by the module definition


def _round_up(x, m):
    return (x + m - 1) // m * m


def net_kernel(xt_ref, w1_ref, b1_ref, w2_ref, b2_ref, yt_ref):
    # xt: (n_states, TB)  -- batch on lanes
    # w1: (H_PAD, n_states), b1: (H_PAD, 1)
    # w2: (n_actions, H_PAD), b2: (n_actions, 1)
    xt = xt_ref[...]
    h = jnp.dot(w1_ref[...], xt, preferred_element_type=jnp.float32) + b1_ref[...]
    h = jnp.maximum(h, 0.0)                                   # (H_PAD, TB)
    yt = jnp.dot(w2_ref[...], h, preferred_element_type=jnp.float32) + b2_ref[...]
    yt_ref[...] = yt.astype(yt_ref.dtype)                     # (n_actions, TB)


def prepare_params(w1, b1, w2, b2):
    """One-time conversion of PyTorch-layout params to the kernel layout.

    w1: (hidden, n_states)   (PyTorch nn.Linear weight layout: (out, in))
    b1: (hidden,)
    w2: (n_actions, hidden)
    b2: (n_actions,)
    Pads only the hidden dim (30 -> 32) on the sublane axis; the padded hidden
    units have zero weight and zero bias, so relu(0)=0 contributes nothing.
    """
    hidden, _ = w1.shape
    n_actions = w2.shape[0]
    hp = _round_up(hidden, SUBLANE)
    w1p = jnp.pad(w1, ((0, hp - hidden), (0, 0)))
    b1p = jnp.pad(b1.reshape(hidden, 1), ((0, hp - hidden), (0, 0)))
    w2p = jnp.pad(w2, ((0, 0), (0, hp - hidden)))
    b2p = b2.reshape(n_actions, 1)
    return w1p, b1p, w2p, b2p


@functools.partial(jax.jit, static_argnames=("block_batch", "gridless_max"))
def net_forward(x, w1p, b1p, w2p, b2p, *, block_batch=2048, gridless_max=1024):
    """x: (B, n_states) f32 -> (B, n_actions) f32. Params from prepare_params()."""
    B, n_states = x.shape
    hp = w1p.shape[0]
    n_actions = w2p.shape[0]

    xt = x.T  # (n_states, B): batch on the lane axis (cheap layout plumbing)

    if B <= gridless_max:
        # Action-selection / medium batches: one gridless call, everything
        # (a few tens of KiB) lives in VMEM, zero pipeline bookkeeping.
        yt = pl.pallas_call(
            net_kernel,
            out_shape=jax.ShapeDtypeStruct((n_actions, B), jnp.float32),
            in_specs=[pl.BlockSpec(memory_space=pltpu.MemorySpace.VMEM)] * 5,
            out_specs=pl.BlockSpec(memory_space=pltpu.MemorySpace.VMEM),
        )(xt, w1p, b1p, w2p, b2p)
    else:
        # Large batches: tile only the lane (batch) axis with big tiles.
        # Cap the tile at ceil(B/2) (rounded to a lane multiple) so the
        # "parallel" axis always has >= 2 steps (keeps both v7x TCs busy).
        tb = min(_round_up(block_batch, LANE),
                 _round_up(pl.cdiv(B, 2), LANE))
        grid = pl.cdiv(B, tb)  # ragged last block handled by Pallas (no jnp.pad)
        yt = pl.pallas_call(
            net_kernel,
            out_shape=jax.ShapeDtypeStruct((n_actions, B), jnp.float32),
            grid=(grid,),
            in_specs=[
                pl.BlockSpec((n_states, tb), lambda i: (0, i)),
                pl.BlockSpec((hp, n_states), lambda i: (0, 0)),  # VMEM-resident
                pl.BlockSpec((hp, 1), lambda i: (0, 0)),
                pl.BlockSpec((n_actions, hp), lambda i: (0, 0)),
                pl.BlockSpec((n_actions, 1), lambda i: (0, 0)),
            ],
            out_specs=pl.BlockSpec((n_actions, tb), lambda i: (0, i)),
            compiler_params=pltpu.CompilerParams(
                dimension_semantics=("parallel",)),
        )(xt, w1p, b1p, w2p, b2p)

    return yt.T  # (B, n_actions)


def init_params(key, n_states, n_actions, hidden=HIDDEN):
    """PyTorch nn.Linear default init: U(-1/sqrt(fan_in), 1/sqrt(fan_in)),
    weights stored in PyTorch (out, in) layout."""
    k1, k2, k3, k4 = jax.random.split(key, 4)
    bound1 = 1.0 / jnp.sqrt(jnp.float32(n_states))
    bound2 = 1.0 / jnp.sqrt(jnp.float32(hidden))
    w1 = jax.random.uniform(k1, (hidden, n_states), jnp.float32, -bound1, bound1)
    b1 = jax.random.uniform(k2, (hidden,), jnp.float32, -bound1, bound1)
    w2 = jax.random.uniform(k3, (n_actions, hidden), jnp.float32, -bound2, bound2)
    b2 = jax.random.uniform(k4, (n_actions,), jnp.float32, -bound2, bound2)
    return w1, b1, w2, b2


if __name__ == "__main__":
    key = jax.random.PRNGKey(0)
    k_params, k_x1, k_x2 = jax.random.split(key, 3)

    n_states = 8   # DQN state dimension
    n_actions = 4  # DQN action count

    w1, b1, w2, b2 = init_params(k_params, n_states, n_actions)
    # Hoisted, one-time weight preprocessing (not inside the per-call jit).
    w1p, b1p, w2p, b2p = jax.tree.map(
        jax.block_until_ready, prepare_params(w1, b1, w2, b2))

    def ref_fn(x):
        return jnp.maximum(x @ w1.T + b1, 0.0) @ w2.T + b2

    # --- Small batch (action selection): gridless single-shot path ---
    x_small = jax.random.normal(k_x1, (2, n_states), jnp.float32)
    out_small = jax.block_until_ready(net_forward(x_small, w1p, b1p, w2p, b2p))
    assert out_small.shape == (2, n_actions)
    assert jnp.allclose(out_small, ref_fn(x_small), atol=1e-4, rtol=1e-4)

    # --- Larger batch: batch-tiled, weight-resident, ragged-last-block path ---
    # (small thresholds here just to exercise the gridded path at test scale;
    #  production defaults are block_batch=2048 / gridless_max=1024)
    x_big = jax.random.normal(k_x2, (300, n_states), jnp.float32)
    out_big = jax.block_until_ready(
        net_forward(x_big, w1p, b1p, w2p, b2p, block_batch=128, gridless_max=64))
    assert out_big.shape == (300, n_actions)
    assert jnp.allclose(out_big, ref_fn(x_big), atol=1e-4, rtol=1e-4)

    # Same batch through the default (gridless) path as well.
    out_big2 = jax.block_until_ready(net_forward(x_big, w1p, b1p, w2p, b2p))
    assert jnp.allclose(out_big2, ref_fn(x_big), atol=1e-4, rtol=1e-4)

    print("KERNEL_OK")
</pallas_src>

<mosaic_0001>
module attributes {stable_mosaic.version = 11 : i64} {
  func.func @net_kernel(%arg0: memref<8x2xf32, #tpu.memory_space<vmem>>, %arg1: memref<32x8xf32, #tpu.memory_space<vmem>>, %arg2: memref<32x1xf32, #tpu.memory_space<vmem>>, %arg3: memref<4x32xf32, #tpu.memory_space<vmem>>, %arg4: memref<4x1xf32, #tpu.memory_space<vmem>>, %arg5: memref<4x2xf32, #tpu.memory_space<vmem>>) attributes {dimension_semantics = [], scalar_prefetch = 0 : i64, scratch_operands = 0 : i64, tpu.core_type = #tpu.core_type<tc>} {
    %c0 = arith.constant 0 : index
    %c0_0 = arith.constant 0 : index
    %0 = vector.load %arg0[%c0, %c0_0] : memref<8x2xf32, #tpu.memory_space<vmem>>, vector<8x2xf32>
    %c0_1 = arith.constant 0 : index
    %c0_2 = arith.constant 0 : index
    %1 = vector.load %arg1[%c0_1, %c0_2] : memref<32x8xf32, #tpu.memory_space<vmem>>, vector<32x8xf32>
    %cst = arith.constant dense<0.000000e+00> : vector<32x2xf32>
    %2 = tpu.matmul %1, %0, %cst {dimension_numbers = #tpu.dot_dimension_numbers<[1], [0], [0], [1], [0, 0, 1, 1], [], []>} : vector<32x8xf32>, vector<8x2xf32>, vector<32x2xf32> -> vector<32x2xf32>
    %c0_3 = arith.constant 0 : index
    %c0_4 = arith.constant 0 : index
    %3 = vector.load %arg2[%c0_3, %c0_4] : memref<32x1xf32, #tpu.memory_space<vmem>>, vector<32x1xf32>
    %4 = vector.broadcast %3 : vector<32x1xf32> to vector<32x2xf32>
    %5 = arith.addf %2, %4 : vector<32x2xf32>
    %cst_5 = arith.constant 0.000000e+00 : f32
    %6 = vector.broadcast %cst_5 : f32 to vector<32x2xf32>
    %7 = arith.maximumf %5, %6 : vector<32x2xf32>
    %c0_6 = arith.constant 0 : index
    %c0_7 = arith.constant 0 : index
    %8 = vector.load %arg3[%c0_6, %c0_7] : memref<4x32xf32, #tpu.memory_space<vmem>>, vector<4x32xf32>
    %cst_8 = arith.constant dense<0.000000e+00> : vector<4x2xf32>
    %9 = tpu.matmul %8, %7, %cst_8 {dimension_numbers = #tpu.dot_dimension_numbers<[1], [0], [0], [1], [0, 0, 1, 1], [], []>} : vector<4x32xf32>, vector<32x2xf32>, vector<4x2xf32> -> vector<4x2xf32>
    %c0_9 = arith.constant 0 : index
    %c0_10 = arith.constant 0 : index
    %10 = vector.load %arg4[%c0_9, %c0_10] : memref<4x1xf32, #tpu.memory_space<vmem>>, vector<4x1xf32>
    %11 = vector.broadcast %10 : vector<4x1xf32> to vector<4x2xf32>
    %12 = arith.addf %9, %11 : vector<4x2xf32>
    %c0_11 = arith.constant 0 : index
    %c0_12 = arith.constant 0 : index
    %13 = vector.load %arg5[%c0_11, %c0_12] : memref<4x2xf32, #tpu.memory_space<vmem>>, vector<4x2xf32>
    tpu.vector_store %arg5[%c0_11, %c0_12], %12 {strides = array<i32>} : memref<4x2xf32, #tpu.memory_space<vmem>>, vector<4x2xf32>,
    return
  }
}

</mosaic_0001>

<llo_original>
// kernel: net_forward.1
$region0: #{net_forward.1}
  #allocation0 [shape = 'u32[]', space=smem, size = 0x4, offset = 0x4, fixed_abs, tag = 'smem constant byte address 0x4 - core index']
  #allocation1 [shape = 'u32[144,128]{1,0:T(1,128)}', space=vmem, size = 0x12000, scoped, tag = 'internal scratch']
  %s0 = inlined_call_operand.vmem [shape: f32[8,2], index: 0, kind: input, shape index: {}]
  %s1 = inlined_call_operand.vmem [shape: f32[32,8], index: 1, kind: input, shape index: {}]
  %s2 = inlined_call_operand.vmem [shape: f32[32,1], index: 2, kind: input, shape index: {}]
  %s3 = inlined_call_operand.vmem [shape: f32[4,32], index: 3, kind: input, shape index: {}]
  %s4 = inlined_call_operand.vmem [shape: f32[4,1], index: 4, kind: input, shape index: {}]
  %s5 = inlined_call_operand.vmem [shape: f32[4,2], index: 5, kind: output, shape index: {}]
  %s6 = sld [smem:[#allocation0]]
  $region30: #{net_forward.1} parent=0
    _
  %s8 = ssub.s32 1, %s6
  %s9 = scalar_select 0, %s8, %s6
  // Predicated region
  $region2: #{net_forward.1} parent=0 // pred_check
    _
  $region3: #{net_forward.1} parent=0 // pred_check_branch
    %11 = sbr.rel (0) target = $region5
  $region4: #{net_forward.1} parent=0 // pred_region
    _
  $region5: #{net_forward.1} parent=0 // pred_fallthru
    _
  // Predicated region
  $region6: #{net_forward.1} parent=0 // pred_check
    _
  $region7: #{net_forward.1} parent=0 // pred_check_branch
    %13 = sbr.rel (0) target = $region9
  $region8: #{net_forward.1} parent=0 // pred_region
    _
  $region9: #{net_forward.1} parent=0 // pred_fallthru
    _
  // Predicated region
  $region10: #{net_forward.1} parent=0 // pred_check
    _
  $region11: #{net_forward.1} parent=0 // pred_check_branch
    %15 = sbr.rel (0) target = $region13
  $region12: #{net_forward.1} parent=0 // pred_region
    _
  $region13: #{net_forward.1} parent=0 // pred_fallthru
    _
  // Predicated region
  $region14: #{net_forward.1} parent=0 // pred_check
    _
  $region15: #{net_forward.1} parent=0 // pred_check_branch
    %17 = sbr.rel (0) target = $region17
  $region16: #{net_forward.1} parent=0 // pred_region
    _
  $region17: #{net_forward.1} parent=0 // pred_fallthru
    _
  // Predicated region
  $region18: #{net_forward.1} parent=0 // pred_check
    _
  $region19: #{net_forward.1} parent=0 // pred_check_branch
    %19 = sbr.rel (0) target = $region21
  $region20: #{net_forward.1} parent=0 // pred_region
    _
  $region21: #{net_forward.1} parent=0 // pred_fallthru
    _
  %v20 = vld [vmem:[%s0] sm:$0xff]
  %v21 = vld [vmem:[%s1] sm:$0xff]
  %v22 = vld [vmem:[%s1 + $0x8] sm:$0xff]
  %v23 = vld [vmem:[%s1 + $0x10] sm:$0xff]
  %v24 = vld [vmem:[%s1 + $0x18] sm:$0xff]
  %v25 = vld [vmem:[%s2] sm:$0xff]
  %v26 = vld [vmem:[%s2 + $0x8] sm:$0xff]
  %v27 = vld [vmem:[%s2 + $0x10] sm:$0xff]
  %v28 = vld [vmem:[%s2 + $0x18] sm:$0xff]
  %30 = vset.pattern.permute.xlu0 0
  %31 = vperm.xlu0 %30, %v25
  %v32 = vpop.permute.xlu0 %31
  %35 = vset.pattern.permute.xlu0 0
  %36 = vperm.xlu0 %35, %v26
  %v37 = vpop.permute.xlu0 %36
  %40 = vset.pattern.permute.xlu0 0
  %41 = vperm.xlu0 %40, %v27
  %v42 = vpop.permute.xlu0 %41
  %45 = vset.pattern.permute.xlu0 0
  %46 = vperm.xlu0 %45, %v28
  %v47 = vpop.permute.xlu0 %46
  %vm49 = vcmask 64512
  %v51 = vsel %vm49, %v21, 0
  %v54 = vsel %vm49, %v22, 0
  %v57 = vsel %vm49, %v23, 0
  %v60 = vsel %vm49, %v24, 0
  %62 = vmatprep.subr.mxu0 0.0
  %63 = vmatpush1.msra.mxu0 %v20
  %64 = vmatprep.subr.mxu0 0.0
  %65 = vmatpush1.msra.mxu0 0.0
  %66 = vmatprep.subr.mxu0 0.0
  %67 = vmatpush1.msra.mxu0 0.0
  %68 = vmatprep.subr.mxu0 0.0
  %69 = vmatpush1.msra.mxu0 0.0
  %70 = vmatprep.subr.mxu0 0.0
  %71 = vmatpush1.msra.mxu0 0.0
  %72 = vmatprep.subr.mxu0 0.0
  %73 = vmatpush1.msra.mxu0 0.0
  %74 = vmatprep.subr.mxu0 0.0
  %75 = vmatpush1.msra.mxu0 0.0
  %76 = vmatprep.subr.mxu0 0.0
  %77 = vmatpush1.msra.mxu0 0.0
  %78 = vmatprep.subr.mxu0 0.0
  %79 = vmatpush1.msra.mxu0 0.0
  %80 = vmatprep.subr.mxu0 0.0
  %81 = vmatpush1.msra.mxu0 0.0
  %82 = vmatprep.subr.mxu0 0.0
  %83 = vmatpush1.msra.mxu0 0.0
  %84 = vmatprep.subr.mxu0 0.0
  %85 = vmatpush1.msra.mxu0 0.0
  %86 = vmatprep.subr.mxu0 0.0
  %87 = vmatpush1.msra.mxu0 0.0
  %88 = vmatprep.subr.mxu0 0.0
  %89 = vmatpush1.msra.mxu0 0.0
  %90 = vmatprep.subr.mxu0 0.0
  %91 = vmatpush1.msra.mxu0 0.0
  %92 = vmatprep.subr.mxu0 0.0
  %93 = vmatpush1.msra.mxu0 0.0
  %94 = vmatprep.subr.mxu0 0.0
  %95 = vmatpush1.msra.mxu0 0.0
  %96 = vmatprep.subr.mxu0 0.0
  %97 = vmatpush1.msra.mxu0 0.0
  %98 = vmatprep.subr.mxu0 0.0
  %99 = vmatpush1.msra.mxu0 0.0
  %100 = vmatprep.subr.mxu0 0.0
  %101 = vmatpush1.msra.mxu0 0.0
  %102 = vmatprep.subr.mxu0 0.0
  %103 = vmatpush1.msra.mxu0 0.0
  %104 = vmatprep.subr.mxu0 0.0
  %105 = vmatpush1.msra.mxu0 0.0
  %106 = vmatprep.subr.mxu0 0.0
  %107 = vmatpush1.msra.mxu0 0.0
  %108 = vmatprep.subr.mxu0 0.0
  %109 = vmatpush1.msra.mxu0 0.0
  %110 = vmatprep.subr.mxu0 0.0
  %111 = vmatpush1.msra.mxu0 0.0
  %112 = vmatprep.subr.mxu0 0.0
  %113 = vmatpush1.msra.mxu0 0.0
  %114 = vmatprep.subr.mxu0 0.0
  %115 = vmatpush1.msra.mxu0 0.0
  %116 = vmatprep.subr.mxu0 0.0
  %117 = vmatpush1.msra.mxu0 0.0
  %118 = vmatprep.subr.mxu0 0.0
  %119 = vmatpush1.msra.mxu0 0.0
  %120 = vmatprep.subr.mxu0 0.0
  %121 = vmatpush1.msra.mxu0 0.0
  %122 = vmatprep.subr.mxu0 0.0
  %123 = vmatpush1.msra.mxu0 0.0
  %124 = vmatprep.subr.mxu0 0.0
  %125 = vmatpush1.msra.mxu0 0.0
  %126 = vmatprep.mubr.f32.mxu0 0.0
  %127 = vmatmul.mubr.f32.gmra.mrb[0].mxu0 %v51
  %v128 = vpop.f32.mrb[0].mxu0
  %v129 = vadd.f32 %v32, %v128
  %v130 = vpop.f32.mrb[0].mxu0
  %131 = vmatprep.mubr.f32.mxu0 0.0
  %132 = vmatmul.mubr.f32.gmra.mrb[0].mxu0 %v54
  %v133 = vpop.f32.mrb[0].mxu0
  %v134 = vadd.f32 %v37, %v133
  %v135 = vpop.f32.mrb[0].mxu0
  %136 = vmatprep.mubr.f32.mxu0 0.0
  %137 = vmatmul.mubr.f32.gmra.mrb[0].mxu0 %v57
  %v138 = vpop.f32.mrb[0].mxu0
  %v139 = vadd.f32 %v42, %v138
  %v140 = vpop.f32.mrb[0].mxu0
  %141 = vmatprep.mubr.f32.mxu0 0.0
  %142 = vmatmul.mubr.f32.gmra.mrb[0].mxu0 %v60
  %v143 = vpop.f32.mrb[0].mxu0
  %v144 = vadd.f32 %v47, %v143
  %v145 = vpop.f32.mrb[0].mxu0
  %146 = vdwg.mxu0
  %v147 = vmax.f32 %v129, 0.0
  %v148 = vmax.f32 %v134, 0.0
  %v149 = vmax.f32 %v139, 0.0
  %v150 = vmax.f32 %v144, 0.0
  %v151 = vld [vmem:[%s3] sm:$0xf]
  %v152 = vld [vmem:[%s4] sm:$0xf]
  %154 = vset.pattern.permute.xlu0 0
  %155 = vperm.xlu0 %154, %v152
  %v156 = vpop.permute.xlu0 %155
  %vm158 = vcmask 261120
  %v160 = vsel %vm158, %v151, 0
  %162 = vmatprep.subr.mxu0 0.0
  %163 = vmatpush1.msra.mxu0 %v147
  %164 = vmatprep.subr.mxu0 0.0
  %165 = vmatpush1.msra.mxu0 %v148
  %166 = vmatprep.subr.mxu0 0.0
  %167 = vmatpush1.msra.mxu0 %v149
  %168 = vmatprep.subr.mxu0 0.0
  %169 = vmatpush1.msra.mxu0 %v150
  %170 = vmatprep.subr.mxu0 0.0
  %171 = vmatpush1.msra.mxu0 0.0
  %172 = vmatprep.subr.mxu0 0.0
  %173 = vmatpush1.msra.mxu0 0.0
  %174 = vmatprep.subr.mxu0 0.0
  %175 = vmatpush1.msra.mxu0 0.0
  %176 = vmatprep.subr.mxu0 0.0
  %177 = vmatpush1.msra.mxu0 0.0
  %178 = vmatprep.subr.mxu0 0.0
  %179 = vmatpush1.msra.mxu0 0.0
  %180 = vmatprep.subr.mxu0 0.0
  %181 = vmatpush1.msra.mxu0 0.0
  %182 = vmatprep.subr.mxu0 0.0
  %183 = vmatpush1.msra.mxu0 0.0
  %184 = vmatprep.subr.mxu0 0.0
  %185 = vmatpush1.msra.mxu0 0.0
  %186 = vmatprep.subr.mxu0 0.0
  %187 = vmatpush1.msra.mxu0 0.0
  %188 = vmatprep.subr.mxu0 0.0
  %189 = vmatpush1.msra.mxu0 0.0
  %190 = vmatprep.subr.mxu0 0.0
  %191 = vmatpush1.msra.mxu0 0.0
  %192 = vmatprep.subr.mxu0 0.0
  %193 = vmatpush1.msra.mxu0 0.0
  %194 = vmatprep.subr.mxu0 0.0
  %195 = vmatpush1.msra.mxu0 0.0
  %196 = vmatprep.subr.mxu0 0.0
  %197 = vmatpush1.msra.mxu0 0.0
  %198 = vmatprep.subr.mxu0 0.0
  %199 = vmatpush1.msra.mxu0 0.0
  %200 = vmatprep.subr.mxu0 0.0
  %201 = vmatpush1.msra.mxu0 0.0
  %202 = vmatprep.subr.mxu0 0.0
  %203 = vmatpush1.msra.mxu0 0.0
  %204 = vmatprep.subr.mxu0 0.0
  %205 = vmatpush1.msra.mxu0 0.0
  %206 = vmatprep.subr.mxu0 0.0
  %207 = vmatpush1.msra.mxu0 0.0
  %208 = vmatprep.subr.mxu0 0.0
  %209 = vmatpush1.msra.mxu0 0.0
  %210 = vmatprep.subr.mxu0 0.0
  %211 = vmatpush1.msra.mxu0 0.0
  %212 = vmatprep.subr.mxu0 0.0
  %213 = vmatpush1.msra.mxu0 0.0
  %214 = vmatprep.subr.mxu0 0.0
  %215 = vmatpush1.msra.mxu0 0.0
  %216 = vmatprep.subr.mxu0 0.0
  %217 = vmatpush1.msra.mxu0 0.0
  %218 = vmatprep.subr.mxu0 0.0
  %219 = vmatpush1.msra.mxu0 0.0
  %220 = vmatprep.subr.mxu0 0.0
  %221 = vmatpush1.msra.mxu0 0.0
  %222 = vmatprep.subr.mxu0 0.0
  %223 = vmatpush1.msra.mxu0 0.0
  %224 = vmatprep.subr.mxu0 0.0
  %225 = vmatpush1.msra.mxu0 0.0
  %226 = vmatprep.mubr.f32.mxu0 0.0
  %227 = vmatmul.mubr.f32.gmra.mrb[0].mxu0 %v160
  %v228 = vpop.f32.mrb[0].mxu0
  %v229 = vadd.f32 %v156, %v228
  %v230 = vpop.f32.mrb[0].mxu0
  %231 = vdwg.mxu0
  %vm232 = vcmask 11264
  %233 = vst.msk [vmem:[%s5] sm:$0xf] %vm232, %v229
  // Predicated region
  $region22: #{net_forward.1} parent=0 // pred_check
    _
  $region23: #{net_forward.1} parent=0 // pred_check_branch
    %235 = sbr.rel (0) target = $region25
  $region24: #{net_forward.1} parent=0 // pred_region
    _
  $region25: #{net_forward.1} parent=0 // pred_fallthru
    _
  // Predicated region
  $region26: #{net_forward.1} parent=0 // pred_check
    _
  $region27: #{net_forward.1} parent=0 // pred_check_branch
    %237 = sbr.rel (0) target = $region29
  $region28: #{net_forward.1} parent=0 // pred_region
    _
  $region29: #{net_forward.1} parent=0 // pred_fallthru
    _

</llo_original>
